<compile_context>
chip_gen: v7x
topology: tpu7x:2x2x1
jax: 0.10.0
libtpu: 0.0.40
codegen_flags: <defaults>
</compile_context>

<pallas_src>
import functools

import jax
import jax.numpy as jnp
from jax import lax
from jax.experimental import pallas as pl
from jax.experimental.pallas import tpu as pltpu

LANE = 512            # last-dim width: multiple of 128 lanes (lane-dense blocks)
TILE_ROWS_MAX = 1024  # rows per grid step: block <= 1024*512*4 B = 2 MiB per input


def _round_up(a, b):
    return (a + b - 1) // b * b


def _focal_loss_sum_kernel(logits_ref, label_ref, out_ref, *, alpha, gamma, total):
    # logits_ref / label_ref blocks: (TR, LANE); out_ref block: (1, 1, 1)
    x = logits_ref[...].astype(jnp.float32)
    y = label_ref[...].astype(jnp.float32)

    # Stable BCE-with-logits and sigmoid from a single exp(-|x|):
    #   e  = exp(-|x|)                 in (0, 1]
    #   ce = max(x, 0) - x*y + log(1+e)   (log1p not needed since e <= 1)
    #   sigmoid(x) = 1/(1+e) if x >= 0 else 1 - 1/(1+e)
    e = jnp.exp(-jnp.abs(x))
    r = pl.reciprocal(1.0 + e, approx=True)           # EUP slot, near-free
    probs = jnp.where(x >= 0.0, r, 1.0 - r)
    ce = jnp.maximum(x, 0.0) - x * y + jnp.log(1.0 + e)

    is_pos = y == 1.0
    one_minus_pt = jnp.where(is_pos, 1.0 - probs, probs)
    alpha_w = jnp.where(is_pos, alpha, 1.0 - alpha)    # single select

    if float(gamma) == 2.0:
        mod = one_minus_pt * one_minus_pt
    else:
        mod = jnp.power(one_minus_pt, gamma)

    loss = alpha_w * mod * ce

    # Mask the zero-padded tail of the flattened input so it adds nothing.
    tr, lane = logits_ref.shape
    row0 = pl.program_id(0) * tr
    rows = lax.broadcasted_iota(jnp.int32, (tr, lane), 0) + row0
    cols = lax.broadcasted_iota(jnp.int32, (tr, lane), 1)
    flat_idx = rows * lane + cols
    loss = jnp.where(flat_idx < total, loss, 0.0)

    out_ref[...] = jnp.sum(loss).reshape(1, 1, 1)


def focal_loss(logits, label, alpha=0.25, gamma=2.0, reduction="mean"):
    """Pallas implementation of FocalLossV1.forward (reduction 'mean'/'sum')."""
    logits = logits.astype(jnp.float32)
    # Mirror the torch forward's ndim fix-up.
    if logits.shape != label.shape:
        if logits.ndim == 5 and label.ndim == 4:
            logits = jnp.squeeze(logits, axis=2)
        elif logits.ndim == 4 and label.ndim == 5:
            logits = jnp.expand_dims(logits, axis=2)
    assert logits.shape == label.shape, (logits.shape, label.shape)
    label = label.astype(jnp.float32)

    total = int(logits.size)
    rows = pl.cdiv(total, LANE)
    tile_rows = min(TILE_ROWS_MAX, _round_up(rows, 8))
    rows_pad = _round_up(rows, tile_rows)
    padded = rows_pad * LANE

    x2 = jnp.pad(logits.reshape(-1), (0, padded - total)).reshape(rows_pad, LANE)
    y2 = jnp.pad(label.reshape(-1), (0, padded - total)).reshape(rows_pad, LANE)

    num_tiles = rows_pad // tile_rows

    kernel = functools.partial(
        _focal_loss_sum_kernel,
        alpha=float(alpha), gamma=float(gamma), total=total)

    partial_sums = pl.pallas_call(
        kernel,
        out_shape=jax.ShapeDtypeStruct((num_tiles, 1, 1), jnp.float32),
        grid_spec=pltpu.PrefetchScalarGridSpec(
            num_scalar_prefetch=0,
            grid=(num_tiles,),
            in_specs=[
                pl.BlockSpec((tile_rows, LANE), lambda i: (i, 0)),
                pl.BlockSpec((tile_rows, LANE), lambda i: (i, 0)),
            ],
            out_specs=pl.BlockSpec((1, 1, 1), lambda i: (i, 0, 0)),
        ),
        compiler_params=pltpu.CompilerParams(
            dimension_semantics=("parallel",),
            vmem_limit_bytes=32 * 1024 * 1024,   # explicit, plenty of headroom
        ),
    )(x2, y2)

    loss_sum = jnp.sum(partial_sums)
    if reduction == "mean":
        return loss_sum / total
    if reduction == "sum":
        return loss_sum
    # TODO(synk): reduction='none' (full elementwise tensor output) would need a
    # lane-dense (tile_rows, LANE) output spec instead of per-tile scalar sums.
    raise NotImplementedError("reduction='none' not implemented in Pallas path")


def _reference_focal_loss(logits, label, alpha=0.25, gamma=2.0):
    """Pure-JAX mirror of the torch FocalLossV1 forward (reduction='mean')."""
    logits = logits.astype(jnp.float32)
    y = label.astype(jnp.float32)
    probs = jax.nn.sigmoid(logits)
    pt = jnp.where(y == 1.0, probs, 1.0 - probs)
    alpha_w = jnp.where(y == 1.0, alpha, 1.0 - alpha)
    ce = (jnp.maximum(logits, 0.0) - logits * y
          + jnp.log1p(jnp.exp(-jnp.abs(logits))))      # BCEWithLogits, stable
    loss = alpha_w * jnp.power(1.0 - pt, gamma) * ce
    return jnp.mean(loss)


if __name__ == "__main__":
    key = jax.random.PRNGKey(0)
    k1, k2 = jax.random.split(key)
    N, C, H, W = 2, 4, 16, 16
    logits = jax.random.normal(k1, (N, C, H, W), dtype=jnp.float32)
    label = (jax.random.uniform(k2, (N, C, H, W)) > 0.5).astype(jnp.float32)

    loss = jax.block_until_ready(focal_loss(logits, label))
    ref = jax.block_until_ready(_reference_focal_loss(logits, label))

    # Tolerance loosened slightly because of pl.reciprocal(approx=True).
    assert jnp.allclose(loss, ref, rtol=2e-3, atol=1e-6), (loss, ref)
    print("KERNEL_OK")
</pallas_src>

<mosaic_0001>
module attributes {stable_mosaic.version = 11 : i64} {
  func.func @_focal_loss_sum_kernel(%arg0: i32, %arg1: memref<8x512xf32, #tpu.memory_space<vmem>>, %arg2: memref<8x512xf32, #tpu.memory_space<vmem>>, %arg3: memref<1x1x1xf32, #tpu.memory_space<vmem>>) attributes {dimension_semantics = [#tpu.dimension_semantics<parallel>], iteration_bounds = array<i64: 1>, scalar_prefetch = 0 : i64, scratch_operands = 0 : i64, tpu.core_type = #tpu.core_type<tc>, window_params = [{transform_indices = @transform_0, window_bounds = array<i64: 8, 512>}, {transform_indices = @transform_1, window_bounds = array<i64: 8, 512>}, {transform_indices = @transform_2, window_bounds = array<i64: 1, 1, 1>}]} {
    %c0 = arith.constant 0 : index
    %c0_0 = arith.constant 0 : index
    %0 = vector.load %arg1[%c0, %c0_0] : memref<8x512xf32, #tpu.memory_space<vmem>>, vector<8x512xf32>
    %c0_1 = arith.constant 0 : index
    %c0_2 = arith.constant 0 : index
    %1 = vector.load %arg2[%c0_1, %c0_2] : memref<8x512xf32, #tpu.memory_space<vmem>>, vector<8x512xf32>
    %2 = math.absf %0 : vector<8x512xf32>
    %cst = arith.constant 0.000000e+00 : f32
    %3 = vector.broadcast %cst : f32 to vector<8x512xf32>
    %4 = arith.subf %3, %2 : vector<8x512xf32>
    %5 = math.exp %4 : vector<8x512xf32>
    %cst_3 = arith.constant 1.000000e+00 : f32
    %6 = vector.broadcast %cst_3 : f32 to vector<8x512xf32>
    %7 = arith.addf %6, %5 : vector<8x512xf32>
    %8 = tpu.reciprocal %7 {approx = true} : vector<8x512xf32> -> vector<8x512xf32>
    %cst_4 = arith.constant 0.000000e+00 : f32
    %9 = vector.broadcast %cst_4 : f32 to vector<8x512xf32>
    %10 = arith.cmpf oge, %0, %9 : vector<8x512xf32>
    %cst_5 = arith.constant 1.000000e+00 : f32
    %11 = vector.broadcast %cst_5 : f32 to vector<8x512xf32>
    %12 = arith.subf %11, %8 : vector<8x512xf32>
    %13 = arith.select %10, %8, %12 : vector<8x512xi1>, vector<8x512xf32>
    %cst_6 = arith.constant 0.000000e+00 : f32
    %14 = vector.broadcast %cst_6 : f32 to vector<8x512xf32>
    %15 = arith.maximumf %0, %14 : vector<8x512xf32>
    %16 = arith.mulf %0, %1 : vector<8x512xf32>
    %17 = arith.subf %15, %16 : vector<8x512xf32>
    %cst_7 = arith.constant 1.000000e+00 : f32
    %18 = vector.broadcast %cst_7 : f32 to vector<8x512xf32>
    %19 = arith.addf %18, %5 : vector<8x512xf32>
    %20 = math.log %19 : vector<8x512xf32>
    %21 = arith.addf %17, %20 : vector<8x512xf32>
    %cst_8 = arith.constant 1.000000e+00 : f32
    %22 = vector.broadcast %cst_8 : f32 to vector<8x512xf32>
    %23 = arith.cmpf oeq, %1, %22 : vector<8x512xf32>
    %cst_9 = arith.constant 1.000000e+00 : f32
    %24 = vector.broadcast %cst_9 : f32 to vector<8x512xf32>
    %25 = arith.subf %24, %13 : vector<8x512xf32>
    %26 = arith.select %23, %25, %13 : vector<8x512xi1>, vector<8x512xf32>
    %cst_10 = arith.constant 2.500000e-01 : f32
    %cst_11 = arith.constant 7.500000e-01 : f32
    %27 = vector.broadcast %cst_10 : f32 to vector<8x512xf32>
    %28 = vector.broadcast %cst_11 : f32 to vector<8x512xf32>
    %29 = arith.select %23, %27, %28 : vector<8x512xi1>, vector<8x512xf32>
    %30 = arith.mulf %26, %26 : vector<8x512xf32>
    %31 = arith.mulf %29, %30 : vector<8x512xf32>
    %32 = arith.mulf %31, %21 : vector<8x512xf32>
    %c8_i32 = arith.constant 8 : i32
    %33 = arith.muli %arg0, %c8_i32 : i32
    %34 = tpu.iota {dimensions = array<i32: 0>} : vector<8x512xi32>
    %35 = vector.broadcast %33 : i32 to vector<8x512xi32>
    %36 = arith.addi %34, %35 : vector<8x512xi32>
    %37 = tpu.iota {dimensions = array<i32: 1>} : vector<8x512xi32>
    %c512_i32 = arith.constant 512 : i32
    %38 = vector.broadcast %c512_i32 : i32 to vector<8x512xi32>
    %39 = arith.muli %36, %38 : vector<8x512xi32>
    %40 = arith.addi %39, %37 : vector<8x512xi32>
    %c2048_i32 = arith.constant 2048 : i32
    %41 = vector.broadcast %c2048_i32 : i32 to vector<8x512xi32>
    %42 = arith.cmpi slt, %40, %41 : vector<8x512xi32>
    %cst_12 = arith.constant 0.000000e+00 : f32
    %43 = vector.broadcast %cst_12 : f32 to vector<8x512xf32>
    %44 = arith.select %42, %32, %43 : vector<8x512xi1>, vector<8x512xf32>
    %45 = vector.shape_cast %44 : vector<8x512xf32> to vector<1x8x512xf32>
    %cst_13 = arith.constant dense<0.000000e+00> : vector<1xf32>
    %46 = vector.multi_reduction <add>, %45, %cst_13 [1, 2] : vector<1x8x512xf32> to vector<1xf32>
    %47 = vector.shape_cast %46 : vector<1xf32> to vector<1x1x1xf32>
    %48 = vector.extract %47[0, 0, 0] : f32 from vector<1x1x1xf32>
    %49 = vector.broadcast %48 : f32 to vector<1x1x1xf32>
    %c0_14 = arith.constant 0 : index
    %c0_15 = arith.constant 0 : index
    %c0_16 = arith.constant 0 : index
    %50 = vector.load %arg3[%c0_14, %c0_15, %c0_16] : memref<1x1x1xf32, #tpu.memory_space<vmem>>, vector<1x1x1xf32>
    tpu.vector_store %arg3[%c0_14, %c0_15, %c0_16], %49 {strides = array<i32>} : memref<1x1x1xf32, #tpu.memory_space<vmem>>, vector<1x1x1xf32>,
    return
  }
  func.func @transform_0(%arg0: i32) -> (i32, i32) {
    %c0_i32 = arith.constant 0 : i32
    %c0_i32_0 = arith.constant 0 : i32
    return %arg0, %c0_i32 : i32, i32
  }
  func.func @transform_1(%arg0: i32) -> (i32, i32) {
    %c0_i32 = arith.constant 0 : i32
    %c0_i32_0 = arith.constant 0 : i32
    return %arg0, %c0_i32 : i32, i32
  }
  func.func @transform_2(%arg0: i32) -> (i32, i32, i32) {
    %c0_i32 = arith.constant 0 : i32
    %c0_i32_0 = arith.constant 0 : i32
    %c0_i32_1 = arith.constant 0 : i32
    return %arg0, %c0_i32, %c0_i32_0 : i32, i32, i32
  }
}

</mosaic_0001>

<llo_original>
// kernel: tpu_custom_call.1
$region0: #{tpu_custom_call.1}
  #allocation0 [shape = 'u32[]', space=smem, size = 0x4, offset = 0x4, fixed_abs, tag = 'smem constant byte address 0x4 - core index']
  #allocation1 [shape = 'u32[144,128]{1,0:T(1,128)}', space=vmem, size = 0x12000, scoped, tag = 'internal scratch']
  %s0 = inlined_call_operand.hbm [shape: f32[8,512], index: 0, kind: input, shape index: {}]
  %s1 = inlined_call_operand.hbm [shape: f32[8,512], index: 1, kind: input, shape index: {}]
  %s2 = inlined_call_operand.hbm [shape: f32[1,1,1], index: 2, kind: output, shape index: {}]
  %s3 = sld [smem:[#allocation0]]
  $region26: #{tpu_custom_call.1} parent=0
    _
  %s5 = ssub.s32 1, %s3
  %s6 = scalar_select 0, %s5, %s3
  $region1: #{tpu_custom_call.1} parent=0
    #allocation2 [shape = 'u8[16384]{0}', space=vmem, size = 0x4000, scoped, tag = 'input window, operand 0, single buffered']
    #allocation3 [shape = 's32[1]{0}', space=sflag, size = 0x4, scoped, tag = 'scoped memory for tpu_custom_call.1']
    #allocation4 [shape = 's32[1]{0}', space=sflag, size = 0x4, scoped, tag = 'scoped memory for tpu_custom_call.1']
    #allocation5 [shape = 'u8[16384]{0}', space=vmem, size = 0x4000, scoped, tag = 'input window, operand 1, single buffered']
    #allocation6 [shape = 's32[1]{0}', space=sflag, size = 0x4, scoped, tag = 'scoped memory for tpu_custom_call.1']
    #allocation7 [shape = 'u8[512]{0}', space=vmem, size = 0x400, scoped, tag = 'output window, operand 0, single buffered']
    %7 = vsyncpa [#allocation3], 0
    %8 = vsyncpa [#allocation6], 0
    %9 = vsyncpa [#allocation4], 0
    // Predicated region
    $region2: #{tpu_custom_call.1} parent=1 // pred_check
      _
    $region3: #{tpu_custom_call.1} parent=1 // pred_check_branch
      %11 = sbr.rel (0) target = $region5
    $region4: #{tpu_custom_call.1} parent=1 // pred_region
      %s13 = ssub.s32 512, 512
      %14 = vsyncadd [#allocation3], %s13
      %s16 = sshll.u32 [#allocation2], 4
      %s17 = int_to_ptr.vmem [resolvable:$true] %s16
      %19 = dma.hbm_to_vmem [thread:$0]  %s0, 512, %s17, [#allocation3]
    $region5: #{tpu_custom_call.1} parent=1 // pred_fallthru
      _
    // Predicated region
    $region6: #{tpu_custom_call.1} parent=1 // pred_check
      _
    $region7: #{tpu_custom_call.1} parent=1 // pred_check_branch
      %21 = sbr.rel (0) target = $region9
    $region8: #{tpu_custom_call.1} parent=1 // pred_region
      %s23 = ssub.s32 512, 512
      %24 = vsyncadd [#allocation6], %s23
      %s26 = sshll.u32 [#allocation5], 4
      %s27 = int_to_ptr.vmem [resolvable:$true] %s26
      %29 = dma.hbm_to_vmem [thread:$0]  %s1, 512, %s27, [#allocation6]
    $region9: #{tpu_custom_call.1} parent=1 // pred_fallthru
      _
    // Predicated region
    $region10: #{tpu_custom_call.1} parent=1 // pred_check
      _
    $region11: #{tpu_custom_call.1} parent=1 // pred_check_branch
      %31 = sbr.rel (0) target = $region13
    $region12: #{tpu_custom_call.1} parent=1 // pred_region
      %32 = dma.done [#allocation3], 512
    $region13: #{tpu_custom_call.1} parent=1 // pred_fallthru
      _
    // Predicated region
    $region14: #{tpu_custom_call.1} parent=1 // pred_check
      _
    $region15: #{tpu_custom_call.1} parent=1 // pred_check_branch
      %34 = sbr.rel (0) target = $region17
    $region16: #{tpu_custom_call.1} parent=1 // pred_region
      %35 = dma.done [#allocation6], 512
    $region17: #{tpu_custom_call.1} parent=1 // pred_fallthru
      _
    %v36 = vld [vmem:[#allocation2] sm:$0xff]
    %v37 = vld [vmem:[#allocation2 + $0x8] sm:$0xff]
    %v38 = vld [vmem:[#allocation2 + $0x10] sm:$0xff]
    %v39 = vld [vmem:[#allocation2 + $0x18] sm:$0xff]
    %v40 = vld [vmem:[#allocation5] sm:$0xff]
    %v41 = vld [vmem:[#allocation5 + $0x8] sm:$0xff]
    %v42 = vld [vmem:[#allocation5 + $0x10] sm:$0xff]
    %v43 = vld [vmem:[#allocation5 + $0x18] sm:$0xff]
    %v44 = vand.u32 2147483647, %v36
    %v45 = vand.u32 2147483647, %v37
    %v46 = vand.u32 2147483647, %v38
    %v47 = vand.u32 2147483647, %v39
    %v48 = vsub.f32 0.0, %v44
    %v49 = vsub.f32 0.0, %v45
    %v50 = vsub.f32 0.0, %v46
    %v51 = vsub.f32 0.0, %v47
    %v52 = vmul.f32 %v48, 1.442695
    %v53 = vpow.pop %v52
    %v54 = vmul.f32 %v49, 1.442695
    %v55 = vpow.pop %v54
    %v56 = vmul.f32 %v50, 1.442695
    %v57 = vpow.pop %v56
    %v58 = vmul.f32 %v51, 1.442695
    %v59 = vpow.pop %v58
    %v60 = vadd.f32 %v53, 1.0
    %v61 = vadd.f32 %v55, 1.0
    %v62 = vadd.f32 %v57, 1.0
    %v63 = vadd.f32 %v59, 1.0
    %v64 = vrcp.pop %v60
    %v65 = vrcp.pop %v61
    %v66 = vrcp.pop %v62
    %v67 = vrcp.pop %v63
    %vm68 = vcmp.ge.f32.partialorder %v36, 0.0
    %vm69 = vcmp.ge.f32.partialorder %v37, 0.0
    %vm70 = vcmp.ge.f32.partialorder %v38, 0.0
    %vm71 = vcmp.ge.f32.partialorder %v39, 0.0
    %v72 = vsub.f32 1.0, %v64
    %v73 = vsub.f32 1.0, %v65
    %v74 = vsub.f32 1.0, %v66
    %v75 = vsub.f32 1.0, %v67
    %v76 = vsel %vm68, %v64, %v72
    %v77 = vsel %vm69, %v65, %v73
    %v78 = vsel %vm70, %v66, %v74
    %v79 = vsel %vm71, %v67, %v75
    %v80 = vmax.f32 %v36, 0.0
    %v81 = vmax.f32 %v37, 0.0
    %v82 = vmax.f32 %v38, 0.0
    %v83 = vmax.f32 %v39, 0.0
    %v84 = vmul.f32 %v36, %v40
    %v85 = vmul.f32 %v37, %v41
    %v86 = vmul.f32 %v38, %v42
    %v87 = vmul.f32 %v39, %v43
    %v88 = vsub.f32 %v80, %v84
    %v89 = vsub.f32 %v81, %v85
    %v90 = vsub.f32 %v82, %v86
    %v91 = vsub.f32 %v83, %v87
    %v92 = vlog2.pop %v60
    %v93 = vmul.f32 %v92, 0.6931472
    %v94 = vlog2.pop %v61
    %v95 = vmul.f32 %v94, 0.6931472
    %v96 = vlog2.pop %v62
    %v97 = vmul.f32 %v96, 0.6931472
    %v98 = vlog2.pop %v63
    %v99 = vmul.f32 %v98, 0.6931472
    %v100 = vadd.f32 %v88, %v93
    %v101 = vadd.f32 %v89, %v95
    %v102 = vadd.f32 %v90, %v97
    %v103 = vadd.f32 %v91, %v99
    %vm104 = vcmp.eq.f32.partialorder %v40, 1.0
    %vm105 = vcmp.eq.f32.partialorder %v41, 1.0
    %vm106 = vcmp.eq.f32.partialorder %v42, 1.0
    %vm107 = vcmp.eq.f32.partialorder %v43, 1.0
    %v108 = vsub.f32 1.0, %v76
    %v109 = vsub.f32 1.0, %v77
    %v110 = vsub.f32 1.0, %v78
    %v111 = vsub.f32 1.0, %v79
    %v112 = vsel %vm104, %v108, %v76
    %v113 = vsel %vm105, %v109, %v77
    %v114 = vsel %vm106, %v110, %v78
    %v115 = vsel %vm107, %v111, %v79
    %v116 = vsel %vm104, 0.25, 0.75
    %v117 = vsel %vm105, 0.25, 0.75
    %v118 = vsel %vm106, 0.25, 0.75
    %v119 = vsel %vm107, 0.25, 0.75
    %v120 = vmul.f32 %v112, %v112
    %v121 = vmul.f32 %v113, %v113
    %v122 = vmul.f32 %v114, %v114
    %v123 = vmul.f32 %v115, %v115
    %v124 = vmul.f32 %v116, %v120
    %v125 = vmul.f32 %v117, %v121
    %v126 = vmul.f32 %v118, %v122
    %v127 = vmul.f32 %v119, %v123
    %v128 = vmul.f32 %v124, %v100
    %v129 = vmul.f32 %v125, %v101
    %v130 = vmul.f32 %v126, %v102
    %v131 = vmul.f32 %v127, %v103
    %s132 = smul.u32 0, 8
    %v133 = vlaneseq
    %v134 = vshrl.u32 %v133, 7
    %v135 = vstv %s132
    %v136 = vadd.s32 %v134, %v135
    %v137 = vlaneseq
    %v138 = vand.u32 %v137, 127
    %v139 = vadd.s32 %v138, 128
    %v140 = vadd.s32 %v138, 256
    %v141 = vadd.s32 %v138, 384
    %v142 = vmul.u32 %v136, 512
    %v143 = vadd.s32 %v142, %v138
    %v144 = vadd.s32 %v142, %v139
    %v145 = vadd.s32 %v142, %v140
    %v146 = vadd.s32 %v142, %v141
    %vm147 = vcmp.lt.s32.totalorder %v143, 2048
    %vm148 = vcmp.lt.s32.totalorder %v144, 2048
    %vm149 = vcmp.lt.s32.totalorder %v145, 2048
    %vm150 = vcmp.lt.s32.totalorder %v146, 2048
    %v151 = vsel %vm147, %v128, 0.0
    %v152 = vsel %vm148, %v129, 0.0
    %v153 = vsel %vm149, %v130, 0.0
    %v154 = vsel %vm150, %v131, 0.0
    %v155 = vadd.f32 %v151, %v152
    %v156 = vadd.f32 %v155, %v153
    %v157 = vadd.f32 %v156, %v154
    %158 = vadd.xlane.f32.xlu0 %v157
    %v159 = vpop.xlane.xlu0 %158
    %v160 = vrot.slane %v159, 4
    %v161 = vadd.f32 %v159, %v160
    %v162 = vrot.slane %v161, 2
    %v163 = vadd.f32 %v161, %v162
    %v164 = vrot.slane %v163, 1
    %v165 = vadd.f32 %v163, %v164
    %s166 = vtos %v165
    %v167 = vstv %s166
    %vm168 = vcmask 0
    %169 = vst.msk [vmem:[#allocation7] sm:$0x1] %vm168, %v167
    // Predicated region
    $region18: #{tpu_custom_call.1} parent=1 // pred_check
      _
    $region19: #{tpu_custom_call.1} parent=1 // pred_check_branch
      %171 = sbr.rel (0) target = $region21
    $region20: #{tpu_custom_call.1} parent=1 // pred_region
      %s173 = ssub.s32 16, 16
      %174 = vsyncadd [#allocation4], %s173
      %s176 = sshll.u32 [#allocation7], 4
      %s177 = int_to_ptr.vmem [resolvable:$true] %s176
      %179 = dma.vmem_to_hbm [thread:$0]  %s177, 16, %s2, [#allocation4]
    $region21: #{tpu_custom_call.1} parent=1 // pred_fallthru
      _
    // Predicated region
    $region22: #{tpu_custom_call.1} parent=1 // pred_check
      _
    $region23: #{tpu_custom_call.1} parent=1 // pred_check_branch
      %181 = sbr.rel (0) target = $region25
    $region24: #{tpu_custom_call.1} parent=1 // pred_region
      %182 = dma.done [#allocation4], 16
    $region25: #{tpu_custom_call.1} parent=1 // pred_fallthru
      _
    %183 = vsyncpa [#allocation3], 1
    %184 = vsyncpa [#allocation6], 1
    %185 = vsyncpa [#allocation4], 1

</llo_original>
